<compile_context>
chip_gen: v7x
topology: tpu7x:2x2x1
jax: 0.10.0
libtpu: 0.0.40
codegen_flags: <defaults>
</compile_context>

<pallas_src>
import numpy as np
import jax
import jax.numpy as jnp
from jax import lax
from jax.experimental import pallas as pl
from jax.experimental.pallas import tpu as pltpu


def _proto_pred_kernel(q_ref, p_ref, pinfo_ref, out_ref):
    """One grid step == one (batch, HW-tile).

    q_ref:     (1, C, TQ)   bf16 raw (un-normalized) query, channel-major
    p_ref:     (P_pad, C)   bf16 safe_norm'ed prototypes (zero rows for padding)
    pinfo_ref: (P_pad, 1)   f32 compact prototype index (>=0) for valid slots, -1 otherwise
    out_ref:   (1, 2, TQ)   f32 row 0 = softmax-weighted prediction, row 1 = argmax id
    """
    q = q_ref[0]                                       # (C, TQ) bf16
    pn = p_ref[...]                                    # (P_pad, C) bf16
    pinfo = pinfo_ref[...]                             # (P_pad, 1) f32

    # Raw cosine numerators with HW on the lane axis: (P_pad, TQ), f32 accum.
    raw = lax.dot_general(pn, q, (((1,), (0,)), ((), ())),
                          preferred_element_type=jnp.float32)

    # Fold safe_norm(q) into a post-matmul per-column scale:
    #   1/max(||q||, 1e-4) == rsqrt(max(||q||^2, 1e-8)).
    qf = q.astype(jnp.float32)                         # (C, TQ)
    ss = jnp.sum(qf * qf, axis=0, keepdims=True)       # (1, TQ) sublane reduce
    inv = lax.rsqrt(jnp.maximum(ss, 1e-8)) * 20.0      # (1, TQ)
    dists = raw * inv                                  # (P_pad, TQ)

    # Additive-bias masking: invalid rows get -1e30 so exp underflows to 0
    # (no full-size selects needed).
    valid = pinfo >= 0.0                               # (P_pad, 1)
    bias = jnp.where(valid, 0.0, jnp.float32(-1e30))   # (P_pad, 1)
    d_b = dists + bias                                 # (P_pad, TQ)

    m = jnp.max(d_b, axis=0, keepdims=True)            # (1, TQ)
    e = jnp.exp(d_b - m)                               # invalid rows -> 0.0
    denom = jnp.sum(e, axis=0, keepdims=True)          # (1, TQ)
    num = jnp.sum(e * dists, axis=0, keepdims=True)    # (1, TQ)
    pred = num / denom                                 # (1, TQ)

    # Argmax over valid prototypes in compact (selection-order) index,
    # first occurrence on ties.
    is_max = (d_b == m) & valid
    big = jnp.float32(pn.shape[0])
    idx = jnp.min(jnp.where(is_max, pinfo, big), axis=0, keepdims=True)  # (1, TQ)

    out_ref[0, 0:1, :] = pred
    out_ref[0, 1:2, :] = idx


def proto_prediction(qry_cm, protos_n, pinfo):
    """qry_cm: [B, C, HW] bf16 (channel-major), protos_n: [P_pad, C] bf16
    (normalized), pinfo: [P_pad, 1] f32 -> out [B, 2, HW] f32."""
    B, C, HW = qry_cm.shape
    P_pad = protos_n.shape[0]

    # Big HW tiles: per-step fixed cost (~0.35us) is amortized; the q block
    # (double-buffered bf16) stays tiny even on v7x's 64 MiB VMEM.
    TQ = HW
    if HW > 2048:
        for cand in (2048, 1024, 512, 256):
            if HW % cand == 0:
                TQ = cand
                break

    grid = (B, HW // TQ)
    cost = pl.CostEstimate(
        flops=2 * B * HW * P_pad * C,
        transcendentals=B * HW * P_pad,
        bytes_accessed=(qry_cm.size * qry_cm.dtype.itemsize
                        + protos_n.size * protos_n.dtype.itemsize
                        + pinfo.size * 4
                        + B * 2 * HW * 4))

    out = pl.pallas_call(
        _proto_pred_kernel,
        out_shape=jax.ShapeDtypeStruct((B, 2, HW), jnp.float32),
        grid=grid,
        in_specs=[pl.BlockSpec((1, C, TQ), lambda b, t: (b, 0, t)),
                  pl.BlockSpec((P_pad, C), lambda b, t: (0, 0)),
                  pl.BlockSpec((P_pad, 1), lambda b, t: (0, 0))],
        out_specs=pl.BlockSpec((1, 2, TQ), lambda b, t: (b, 0, t)),
        compiler_params=pltpu.CompilerParams(
            dimension_semantics=("parallel", "parallel")),
        cost_estimate=cost,
    )(qry_cm, protos_n, pinfo)
    return out


class ProtoModulePallas:
    """JAX/Pallas port of ProtoModule (gridconv / gridconv+ modes)."""

    def __init__(self, proto_grid_size=8, feature_hw=(32, 32), embed_dim=256):
        self.proto_grid_size = proto_grid_size
        self.feature_hw = list(feature_hw)
        self.embed_dim = embed_dim
        self.kernel_size = [f // proto_grid_size for f in feature_hw]

    def _avg_pool(self, x):
        # AvgPool2d with kernel == stride == self.kernel_size (NCHW)
        B, C, H, W = x.shape
        kh, kw = self.kernel_size
        return x.reshape(B, C, H // kh, kh, W // kw, kw).mean(axis=(3, 5))

    def forward(self, qry, sup_x, sup_y, mode="gridconv", thresh=0.95):
        if mode not in ("gridconv", "gridconv+"):
            # TODO(synk): 'mask' mode (global prototype + cosine-sim max) not implemented here.
            raise ValueError(f"mode {mode!r} not supported in this Pallas port")

        B, C, H, W = sup_x.shape

        # --- prototype extraction: fully on-device, fixed shapes (no host sync) ---
        n_sup_x = self._avg_pool(sup_x)                                   # [B, C, G, G]
        cand = jnp.transpose(n_sup_x, (0, 2, 3, 1)).reshape(-1, C)        # [B*G*G, C]
        sup_y_g = self._avg_pool(sup_y)                                   # [B, 1, G, G]
        proto_grid = jnp.where(sup_y_g < thresh, 0.0, sup_y_g)
        sel = sup_y_g.reshape(-1) > thresh                                # [B*G*G]

        if mode == "gridconv+":
            glb = jnp.sum(sup_x * sup_y, axis=(-1, -2)) / (
                jnp.sum(sup_y, axis=(-1, -2)) + 1e-5)                     # [B, C]
            cand = jnp.concatenate([cand, glb], axis=0)
            sel = jnp.concatenate([sel, jnp.ones((B,), bool)], axis=0)
        # TODO(synk): gridconv fallback to 'mask' mode when no grid cell passes the
        # threshold requires a data-dependent host sync; not implemented here
        # (kernel returns a finite value, not NaN, in that case).

        # compact prototype index (selection order) for valid slots, -1 otherwise
        cidx = jnp.cumsum(sel.astype(jnp.int32)) - 1
        pinfo = jnp.where(sel, cidx.astype(jnp.float32), jnp.float32(-1.0))

        # safe_norm prototypes ONCE in f32 (padded / unselected rows masked in-kernel)
        nrm = jnp.sqrt(jnp.sum(cand * cand, axis=-1, keepdims=True))
        pn = cand / jnp.maximum(nrm, 1e-4)

        P_total = pn.shape[0]                      # static: B*G*G (+B for gridconv+)
        P_pad = max(8, ((P_total + 7) // 8) * 8)   # static -> no per-mask recompiles
        pad = P_pad - P_total
        pn = jnp.pad(pn, ((0, pad), (0, 0)))
        pinfo = jnp.pad(pinfo, ((0, pad),), constant_values=-1.0)[:, None]  # [P_pad, 1]
        # TODO(synk): optional on-device compaction of valid prototypes to the
        # front (+ scalar-prefetched count) would skip dead-prototype work when
        # B*G*G is large and the mask is sparse.

        # --- prediction (Pallas kernel), query consumed in NCHW (no transpose) ---
        Bq = qry.shape[0]
        Hq, Wq = qry.shape[-2], qry.shape[-1]
        qry_cm = qry.reshape(Bq, C, Hq * Wq).astype(jnp.bfloat16)
        out = proto_prediction(qry_cm, pn.astype(jnp.bfloat16),
                               pinfo.astype(jnp.float32))                 # [Bq, 2, HW]

        pred = out[:, 0:1, :].reshape(Bq, 1, Hq, Wq)
        debug_assign = out[:, 1, :].reshape(Bq, Hq, Wq)
        return pred, [debug_assign], proto_grid


def _ref_forward(qry, sup_x, sup_y, grid_size, mode="gridconv", thresh=0.95):
    """Pure numpy (f32) reference of the gridconv/gridconv+ forward for verification."""
    B, C, H, W = sup_x.shape
    kh, kw = H // grid_size, W // grid_size

    def pool(x):
        b, c = x.shape[:2]
        return x.reshape(b, c, grid_size, kh, grid_size, kw).mean(axis=(3, 5))

    n_sup = pool(sup_x).transpose(0, 2, 3, 1).reshape(-1, C)
    sup_y_g = pool(sup_y).reshape(-1)
    protos = n_sup[sup_y_g > thresh]
    if mode == "gridconv+":
        glb = (sup_x * sup_y).sum(axis=(-1, -2)) / (sup_y.sum(axis=(-1, -2)) + 1e-5)
        protos = np.concatenate([protos, glb], axis=0)

    def sn(x, axis):
        n = np.sqrt((x * x).sum(axis=axis, keepdims=True))
        return x / np.maximum(n, 1e-4)

    pn = sn(protos, 1)
    qn = sn(qry, 1)
    dists = np.einsum("bchw,pc->bphw", qn, pn) * 20.0
    e = np.exp(dists - dists.max(axis=1, keepdims=True))
    w = e / e.sum(axis=1, keepdims=True)
    pred = (w * dists).sum(axis=1, keepdims=True)
    dbg = dists.argmax(axis=1).astype(np.float32)
    return pred, dbg, dists


if __name__ == "__main__":
    B, C, H, W = 2, 32, 16, 16
    grid_size = 4  # -> avg-pool kernel 4x4, 4x4 proto grid

    key = jax.random.PRNGKey(0)
    k1, k2 = jax.random.split(key)
    qry = jax.random.normal(k1, (B, C, H, W), jnp.float32)
    sup_x = jax.random.normal(k2, (B, C, H, W), jnp.float32)
    sup_y_np = np.zeros((B, 1, H, W), np.float32)
    sup_y_np[:, :, 0:8, 0:8] = 1.0  # covers 2x2 grid cells per batch -> 8 prototypes total
    sup_y = jnp.asarray(sup_y_np)

    module = ProtoModulePallas(proto_grid_size=grid_size, feature_hw=[H, W], embed_dim=C)

    # gridconv
    pred, debug_assign, proto_grid = module.forward(qry, sup_x, sup_y, mode="gridconv",
                                                    thresh=0.95)
    jax.block_until_ready((pred, debug_assign[0], proto_grid))

    assert pred.shape == (B, 1, H, W)
    assert debug_assign[0].shape == (B, H, W)
    assert proto_grid.shape == (B, 1, grid_size, grid_size)

    ref_pred, ref_dbg, ref_dists = _ref_forward(
        np.asarray(qry), np.asarray(sup_x), np.asarray(sup_y), grid_size, mode="gridconv")
    # bf16 matmul inputs -> tolerances widened vs. a pure f32 run.
    np.testing.assert_allclose(np.asarray(pred), ref_pred, rtol=2e-2, atol=1e-1)

    # argmax check only where the top-1/top-2 margin is well above bf16 noise
    d_sorted = np.sort(ref_dists, axis=1)
    clear = (d_sorted[:, -1] - d_sorted[:, -2]) > 0.2
    np.testing.assert_array_equal(np.asarray(debug_assign[0])[clear], ref_dbg[clear])

    # gridconv+ coverage
    pred_p, dbg_p, _ = module.forward(qry, sup_x, sup_y, mode="gridconv+", thresh=0.95)
    jax.block_until_ready(pred_p)
    ref_pred_p, _, _ = _ref_forward(
        np.asarray(qry), np.asarray(sup_x), np.asarray(sup_y), grid_size, mode="gridconv+")
    np.testing.assert_allclose(np.asarray(pred_p), ref_pred_p, rtol=2e-2, atol=1e-1)

    print("KERNEL_OK")
</pallas_src>

<mosaic_0001>
module attributes {stable_mosaic.version = 11 : i64} {
  func.func @_proto_pred_kernel(%arg0: i32, %arg1: i32, %arg2: memref<1x32x256xbf16, #tpu.memory_space<vmem>>, %arg3: memref<32x32xbf16, #tpu.memory_space<vmem>>, %arg4: memref<32x1xf32, #tpu.memory_space<vmem>>, %arg5: memref<1x2x256xf32, #tpu.memory_space<vmem>>) attributes {dimension_semantics = [#tpu.dimension_semantics<parallel>, #tpu.dimension_semantics<parallel>], iteration_bounds = array<i64: 2, 1>, scalar_prefetch = 0 : i64, scratch_operands = 0 : i64, tpu.core_type = #tpu.core_type<tc>, window_params = [{transform_indices = @transform_0, window_bounds = array<i64: 1, 32, 256>}, {pipeline_mode = #tpu.pipeline_mode<synchronous>, transform_indices = @transform_1, window_bounds = array<i64: 32, 32>}, {pipeline_mode = #tpu.pipeline_mode<synchronous>, transform_indices = @transform_2, window_bounds = array<i64: 32, 1>}, {transform_indices = @transform_3, window_bounds = array<i64: 1, 2, 256>}]} {
    %c0 = arith.constant 0 : index
    %c0_0 = arith.constant 0 : index
    %c0_1 = arith.constant 0 : index
    %0 = vector.load %arg2[%c0, %c0_0, %c0_1] : memref<1x32x256xbf16, #tpu.memory_space<vmem>>, vector<1x32x256xbf16>
    %1 = vector.shape_cast %0 : vector<1x32x256xbf16> to vector<32x256xbf16>
    %c0_2 = arith.constant 0 : index
    %c0_3 = arith.constant 0 : index
    %2 = vector.load %arg3[%c0_2, %c0_3] : memref<32x32xbf16, #tpu.memory_space<vmem>>, vector<32x32xbf16>
    %c0_4 = arith.constant 0 : index
    %c0_5 = arith.constant 0 : index
    %3 = vector.load %arg4[%c0_4, %c0_5] : memref<32x1xf32, #tpu.memory_space<vmem>>, vector<32x1xf32>
    %cst = arith.constant dense<0.000000e+00> : vector<32x256xf32>
    %4 = tpu.matmul %2, %1, %cst {dimension_numbers = #tpu.dot_dimension_numbers<[1], [0], [0], [1], [0, 0, 1, 1], [], []>} : vector<32x32xbf16>, vector<32x256xbf16>, vector<32x256xf32> -> vector<32x256xf32>
    %5 = arith.extf %1 : vector<32x256xbf16> to vector<32x256xf32>
    %6 = arith.mulf %5, %5 : vector<32x256xf32>
    %cst_6 = arith.constant dense<0.000000e+00> : vector<256xf32>
    %7 = vector.multi_reduction <add>, %6, %cst_6 [0] : vector<32x256xf32> to vector<256xf32>
    %8 = vector.shape_cast %7 : vector<256xf32> to vector<1x256xf32>
    %cst_7 = arith.constant 9.99999993E-9 : f32
    %9 = vector.broadcast %cst_7 : f32 to vector<1x256xf32>
    %10 = arith.maximumf %8, %9 : vector<1x256xf32>
    %11 = math.rsqrt %10 : vector<1x256xf32>
    %cst_8 = arith.constant 2.000000e+01 : f32
    %12 = vector.broadcast %cst_8 : f32 to vector<1x256xf32>
    %13 = arith.mulf %11, %12 : vector<1x256xf32>
    %14 = vector.broadcast %13 : vector<1x256xf32> to vector<32x256xf32>
    %15 = arith.mulf %4, %14 : vector<32x256xf32>
    %cst_9 = arith.constant 0.000000e+00 : f32
    %16 = vector.broadcast %cst_9 : f32 to vector<32x1xf32>
    %17 = arith.cmpf oge, %3, %16 : vector<32x1xf32>
    %cst_10 = arith.constant 0.000000e+00 : f32
    %cst_11 = arith.constant -1.000000e+30 : f32
    %18 = vector.broadcast %cst_10 : f32 to vector<32x1xf32>
    %19 = vector.broadcast %cst_11 : f32 to vector<32x1xf32>
    %20 = arith.select %17, %18, %19 : vector<32x1xi1>, vector<32x1xf32>
    %21 = vector.broadcast %20 : vector<32x1xf32> to vector<32x256xf32>
    %22 = arith.addf %15, %21 : vector<32x256xf32>
    %cst_12 = arith.constant dense<0xFF800000> : vector<256xf32>
    %23 = vector.multi_reduction <maximumf>, %22, %cst_12 [0] : vector<32x256xf32> to vector<256xf32>
    %24 = vector.shape_cast %23 : vector<256xf32> to vector<1x256xf32>
    %25 = vector.broadcast %24 : vector<1x256xf32> to vector<32x256xf32>
    %26 = arith.subf %22, %25 : vector<32x256xf32>
    %27 = math.exp %26 : vector<32x256xf32>
    %cst_13 = arith.constant dense<0.000000e+00> : vector<256xf32>
    %28 = vector.multi_reduction <add>, %27, %cst_13 [0] : vector<32x256xf32> to vector<256xf32>
    %29 = vector.shape_cast %28 : vector<256xf32> to vector<1x256xf32>
    %30 = arith.mulf %27, %15 : vector<32x256xf32>
    %cst_14 = arith.constant dense<0.000000e+00> : vector<256xf32>
    %31 = vector.multi_reduction <add>, %30, %cst_14 [0] : vector<32x256xf32> to vector<256xf32>
    %32 = vector.shape_cast %31 : vector<256xf32> to vector<1x256xf32>
    %33 = arith.divf %32, %29 : vector<1x256xf32>
    %34 = vector.broadcast %24 : vector<1x256xf32> to vector<32x256xf32>
    %35 = arith.cmpf oeq, %22, %34 : vector<32x256xf32>
    %36 = vector.broadcast %17 : vector<32x1xi1> to vector<32x256xi1>
    %37 = arith.andi %35, %36 : vector<32x256xi1>
    %cst_15 = arith.constant 3.200000e+01 : f32
    %38 = vector.shape_cast %3 : vector<32x1xf32> to vector<32x1xf32>
    %39 = vector.broadcast %38 : vector<32x1xf32> to vector<32x256xf32>
    %40 = vector.broadcast %cst_15 : f32 to vector<32x256xf32>
    %41 = arith.select %37, %39, %40 : vector<32x256xi1>, vector<32x256xf32>
    %cst_16 = arith.constant dense<0x7F800000> : vector<256xf32>
    %42 = vector.multi_reduction <minimumf>, %41, %cst_16 [0] : vector<32x256xf32> to vector<256xf32>
    %43 = vector.shape_cast %42 : vector<256xf32> to vector<1x256xf32>
    %c0_17 = arith.constant 0 : index
    %c0_18 = arith.constant 0 : index
    %c0_19 = arith.constant 0 : index
    %44 = vector.load %arg5[%c0_17, %c0_18, %c0_19] : memref<1x2x256xf32, #tpu.memory_space<vmem>>, vector<1x1x256xf32>
    %45 = vector.shape_cast %44 : vector<1x1x256xf32> to vector<1x256xf32>
    %46 = vector.shape_cast %33 : vector<1x256xf32> to vector<1x1x256xf32>
    tpu.vector_store %arg5[%c0_17, %c0_18, %c0_19], %46 {strides = array<i32>} : memref<1x2x256xf32, #tpu.memory_space<vmem>>, vector<1x1x256xf32>,
    %c0_20 = arith.constant 0 : index
    %c1 = arith.constant 1 : index
    %c0_21 = arith.constant 0 : index
    %47 = vector.load %arg5[%c0_20, %c1, %c0_21] : memref<1x2x256xf32, #tpu.memory_space<vmem>>, vector<1x1x256xf32>
    %48 = vector.shape_cast %47 : vector<1x1x256xf32> to vector<1x256xf32>
    %49 = vector.shape_cast %43 : vector<1x256xf32> to vector<1x1x256xf32>
    tpu.vector_store %arg5[%c0_20, %c1, %c0_21], %49 {strides = array<i32>} : memref<1x2x256xf32, #tpu.memory_space<vmem>>, vector<1x1x256xf32>,
    return
  }
  func.func @transform_0(%arg0: i32, %arg1: i32) -> (i32, i32, i32) {
    %c0_i32 = arith.constant 0 : i32
    %c0_i32_0 = arith.constant 0 : i32
    return %arg0, %c0_i32, %arg1 : i32, i32, i32
  }
  func.func @transform_1(%arg0: i32, %arg1: i32) -> (i32, i32) {
    %c0_i32 = arith.constant 0 : i32
    %c0_i32_0 = arith.constant 0 : i32
    %c0_i32_1 = arith.constant 0 : i32
    return %c0_i32, %c0_i32_0 : i32, i32
  }
  func.func @transform_2(%arg0: i32, %arg1: i32) -> (i32, i32) {
    %c0_i32 = arith.constant 0 : i32
    %c0_i32_0 = arith.constant 0 : i32
    %c0_i32_1 = arith.constant 0 : i32
    return %c0_i32, %c0_i32_0 : i32, i32
  }
  func.func @transform_3(%arg0: i32, %arg1: i32) -> (i32, i32, i32) {
    %c0_i32 = arith.constant 0 : i32
    %c0_i32_0 = arith.constant 0 : i32
    return %arg0, %c0_i32, %arg1 : i32, i32, i32
  }
}

</mosaic_0001>

<llo_original>
// kernel: tpu_custom_call.1
$region0: #{tpu_custom_call.1}
  #allocation0 [shape = 'u32[]', space=smem, size = 0x4, offset = 0x4, fixed_abs, tag = 'smem constant byte address 0x4 - core index']
  #allocation1 [shape = 'u32[144,128]{1,0:T(1,128)}', space=vmem, size = 0x12000, scoped, tag = 'internal scratch']
  %s0 = inlined_call_operand.hbm [shape: bf16[2,32,256], index: 0, kind: input, shape index: {}]
  %s1 = inlined_call_operand.vmem [shape: bf16[32,32], index: 1, kind: input, shape index: {}]
  %s2 = inlined_call_operand.vmem [shape: f32[32,1], index: 2, kind: input, shape index: {}]
  %s3 = inlined_call_operand.hbm [shape: f32[2,2,256], index: 3, kind: output, shape index: {}]
  %s4 = sld [smem:[#allocation0]]
  $region49: #{tpu_custom_call.1} parent=0
    _
  %s6 = ssub.s32 1, %s4
  %s7 = scalar_select 0, %s6, %s4
  $region1: #{tpu_custom_call.1} parent=0
    #allocation2 [shape = 'u8[32768]{0}', space=vmem, size = 0x8000, scoped, tag = 'input window, operand 0']
    #allocation3 [shape = 's32[2]{0}', space=sflag, size = 0x8, scoped, tag = 'scoped memory for tpu_custom_call.1']
    #allocation4 [shape = 's32[2]{0}', space=sflag, size = 0x8, scoped, tag = 'scoped memory for tpu_custom_call.1']
    #allocation5 [shape = 'u8[4096]{0}', space=vmem, size = 0x1000, scoped, tag = 'output window, operand 0']
    %8 = vsyncpa [#allocation3], 0
    %s9 = scalar_lea.sflag [#allocation3], 1
    %10 = vsyncpa %s9, 0
    %11 = vsyncpa [#allocation4], 0
    %s12 = scalar_lea.sflag [#allocation4], 1
    %13 = vsyncpa %s12, 0
    loop: start=0, step=1, limit=4
    $region2: #{tpu_custom_call.1} parent=1 // loop_pre_header
      _
    $region3: #{tpu_custom_call.1} parent=1 // loop_header
      %s15 = sphi 0, %s19
      %p16 = scmp.ge.s32.totalorder %s15, 4
      %s22 = sphi 0, %s34
      %s23 = sphi 0, %s30
      %s24 = sphi 0, %s22
      %s25 = sphi 0, %s23
      %s26 = sphi 0, %s24
      %s27 = sphi 0, %s25
      %s39 = sphi 0, %s41
      %s42 = sphi 0, %s39
      %s43 = sphi 0, %s42
      %s59 = sphi 0, %s43
      %s63 = sphi 0, %s63
      %s65 = sphi 0, %s63
      %s66 = sphi 0, %s65
      %s80 = sphi 0, %s66
      %s84 = sphi 0, %s84
      %s86 = sphi 0, %s84
      %s87 = sphi 0, %s86
      %s101 = sphi 0, %s87
      %s109 = sphi 0, %s111
      %s112 = sphi 0, %s109
      %s113 = sphi 0, %s112
      %s129 = sphi 0, %s113
    $region4: #{tpu_custom_call.1} parent=1 // loop_header_branch
      %18 = sbr.rel (%p16) target = $region8
    $region5: #{tpu_custom_call.1} parent=1 // loop_body
      %s20 = ssub.s32 %s15, 1
      %s21 = ssub.s32 %s15, 2
      %s28 = sadd.s32 1, %s23
      %p29 = scmp.ge.s32.totalorder %s28, 1
      %s30 = scalar_select %p29, 0, %s28
      %s31 = sadd.s32 1, %s22
      %s32 = scalar_select %p29, %s31, %s22
      %p33 = scmp.ge.s32.totalorder %s32, 2
      %s34 = scalar_select %p33, 0, %s32
      %s35 = ssub.s32 %s22, %s34
      %s36 = ssub.s32 %s23, %s30
      %s37 = sor.u32 %s35, %s36
      %p38 = scmp.eq.s32.totalorder %s37, 0
      %s40 = sadd.s32 %s39, 1
      %s41 = scalar_select %p38, %s39, %s40
      %p44 = pneg %p38
      %p45 = scmp.eq.s32.totalorder %s15, 1
      %p46 = por %p44, %p45
      %p47 = scmp.ne.s32.totalorder %s39, %s42
      %p48 = scmp.eq.s32.totalorder %s15, 0
      %p49 = por %p47, %p48
      %p50 = scmp.ne.s32.totalorder %s39, %s42
      %p51 = scmp.eq.s32.totalorder %s20, 1
      %p52 = por %p50, %p51
      %p53 = scmp.ne.s32.totalorder %s42, %s43
      %p54 = scmp.eq.s32.totalorder %s20, 0
      %p55 = por %p53, %p54
      %p56 = scmp.ne.s32.totalorder %s42, %s43
      %p57 = scmp.eq.s32.totalorder %s21, 1
      %p58 = por %p56, %p57
      %p60 = scmp.ne.s32.totalorder %s43, %s59
      %p61 = scmp.eq.s32.totalorder %s21, 0
      %p62 = por %p60, %p61
      %s64 = sadd.s32 %s63, 1
      %p67 = scmp.eq.s32.totalorder %s15, 1
      %p68 = scmp.ne.s32.totalorder %s63, %s65
      %p69 = scmp.eq.s32.totalorder %s15, 0
      %p70 = por %p68, %p69
      %p71 = scmp.ne.s32.totalorder %s63, %s65
      %p72 = scmp.eq.s32.totalorder %s20, 1
      %p73 = por %p71, %p72
      %p74 = scmp.ne.s32.totalorder %s65, %s66
      %p75 = scmp.eq.s32.totalorder %s20, 0
      %p76 = por %p74, %p75
      %p77 = scmp.ne.s32.totalorder %s65, %s66
      %p78 = scmp.eq.s32.totalorder %s21, 1
      %p79 = por %p77, %p78
      %p81 = scmp.ne.s32.totalorder %s66, %s80
      %p82 = scmp.eq.s32.totalorder %s21, 0
      %p83 = por %p81, %p82
      %s85 = sadd.s32 %s84, 1
      %p88 = scmp.eq.s32.totalorder %s15, 1
      %p89 = scmp.ne.s32.totalorder %s84, %s86
      %p90 = scmp.eq.s32.totalorder %s15, 0
      %p91 = por %p89, %p90
      %p92 = scmp.ne.s32.totalorder %s84, %s86
      %p93 = scmp.eq.s32.totalorder %s20, 1
      %p94 = por %p92, %p93
      %p95 = scmp.ne.s32.totalorder %s86, %s87
      %p96 = scmp.eq.s32.totalorder %s20, 0
      %p97 = por %p95, %p96
      %p98 = scmp.ne.s32.totalorder %s86, %s87
      %p99 = scmp.eq.s32.totalorder %s21, 1
      %p100 = por %p98, %p99
      %p102 = scmp.ne.s32.totalorder %s87, %s101
      %p103 = scmp.eq.s32.totalorder %s21, 0
      %p104 = por %p102, %p103
      %s105 = ssub.s32 %s22, %s34
      %s106 = ssub.s32 %s23, %s30
      %s107 = sor.u32 %s105, %s106
      %p108 = scmp.eq.s32.totalorder %s107, 0
      %s110 = sadd.s32 %s109, 1
      %s111 = scalar_select %p108, %s109, %s110
      %p114 = pneg %p108
      %p115 = scmp.eq.s32.totalorder %s15, 1
      %p116 = por %p114, %p115
      %p117 = scmp.ne.s32.totalorder %s109, %s112
      %p118 = scmp.eq.s32.totalorder %s15, 0
      %p119 = por %p117, %p118
      %p120 = scmp.ne.s32.totalorder %s109, %s112
      %p121 = scmp.eq.s32.totalorder %s20, 1
      %p122 = por %p120, %p121
      %p123 = scmp.ne.s32.totalorder %s112, %s113
      %p124 = scmp.eq.s32.totalorder %s20, 0
      %p125 = por %p123, %p124
      %p126 = scmp.ne.s32.totalorder %s112, %s113
      %p127 = scmp.eq.s32.totalorder %s21, 1
      %p128 = por %p126, %p127
      %p130 = scmp.ne.s32.totalorder %s113, %s129
      %p131 = scmp.eq.s32.totalorder %s21, 0
      %p132 = por %p130, %p131
      %p133 = scmp.le.s32.totalorder 1, %s15
      %p134 = scmp.lt.s32.totalorder %s15, 3
      %p135 = pnand %p133, %p134
      %p136 = pneg %p135
      // Predicated region
      $region9: #{tpu_custom_call.1} parent=5 // pred_check
        _
      $region10: #{tpu_custom_call.1} parent=5 // pred_check_branch
        %138 = sbr.rel (%p135) target = $region12
      $region11: #{tpu_custom_call.1} parent=5 // pred_region
        %s139 = ssub.s32 %s15, 1
        // Predicated region
        $region13: #{tpu_custom_call.1} parent=11 // pred_check
          %p140 = pneg %p76
        $region14: #{tpu_custom_call.1} parent=11 // pred_check_branch
          %142 = sbr.rel (%p140) target = $region16
        $region15: #{tpu_custom_call.1} parent=11 // pred_region
          _
        $region16: #{tpu_custom_call.1} parent=11 // pred_fallthru
          _
        // Predicated region
        $region17: #{tpu_custom_call.1} parent=11 // pred_check
          %p143 = pneg %p97
        $region18: #{tpu_custom_call.1} parent=11 // pred_check_branch
          %145 = sbr.rel (%p143) target = $region20
        $region19: #{tpu_custom_call.1} parent=11 // pred_region
          _
        $region20: #{tpu_custom_call.1} parent=11 // pred_fallthru
          _
      $region12: #{tpu_custom_call.1} parent=5 // pred_fallthru
        _
      %p146 = scmp.lt.s32.totalorder %s15, 2
      // Predicated region
      $region21: #{tpu_custom_call.1} parent=5 // pred_check
        %p147 = pneg %p146
      $region22: #{tpu_custom_call.1} parent=5 // pred_check_branch
        %149 = sbr.rel (%p147) target = $region24
      $region23: #{tpu_custom_call.1} parent=5 // pred_region
        // Predicated region
        $region25: #{tpu_custom_call.1} parent=23 // pred_check
          %p150 = pneg %p49
        $region26: #{tpu_custom_call.1} parent=23 // pred_check_branch
          %152 = sbr.rel (%p150) target = $region28
        $region27: #{tpu_custom_call.1} parent=23 // pred_region
          %s153 = sand.u32 %s39, 1
          %s154 = scalar_lea.sflag [#allocation3], %s153
          %s155 = sand.u32 %s39, 1
          %s156 = smul.addr %s155, 32
          %s157 = scalar_lea.vmem [#allocation2], %s156
          %s158 = smul.u32 2, %s23
          %s160 = ssub.s32 512, 512
          %161 = vsyncadd %s154, %s160
          %s162 = smul.addr %s22, 8
          %s163 = sadd.s32 %s158, %s162
          %s164 = smul.addr %s163, 64
          %s165 = scalar_lea.hbm %s0, %s164
          %s166 = sshll.u32 %s157, 4
          %s167 = int_to_ptr.vmem [resolvable:$true] %s166
          %172 = dma.hbm_to_vmem [thread:$0]  %s165, 512, %s167, %s154, 128, 128, 8
        $region28: #{tpu_custom_call.1} parent=23 // pred_fallthru
          _
      $region24: #{tpu_custom_call.1} parent=5 // pred_fallthru
        _
      %p173 = scmp.le.s32.totalorder 1, %s15
      %p174 = scmp.lt.s32.totalorder %s15, 3
      %p175 = pnand %p173, %p174
      %p176 = pneg %p175
      // Predicated region
      $region29: #{tpu_custom_call.1} parent=5 // pred_check
        _
      $region30: #{tpu_custom_call.1} parent=5 // pred_check_branch
        %178 = sbr.rel (%p175) target = $region32
      $region31: #{tpu_custom_call.1} parent=5 // pred_region
        %s179 = ssub.s32 %s15, 1
        %s180 = sand.u32 %s42, 1
        %s181 = scalar_lea.sflag [#allocation3], %s180
        %s182 = sand.u32 %s42, 1
        %s183 = smul.addr %s182, 32
        %s184 = scalar_lea.vmem [#allocation2], %s183
        // Predicated region
        $region33: #{tpu_custom_call.1} parent=31 // pred_check
          %p185 = pneg %p55
        $region34: #{tpu_custom_call.1} parent=31 // pred_check_branch
          %187 = sbr.rel (%p185) target = $region36
        $region35: #{tpu_custom_call.1} parent=31 // pred_region
          %188 = dma.done %s181, 512
        $region36: #{tpu_custom_call.1} parent=31 // pred_fallthru
          _
        %s189 = sand.u32 %s42, 1
        %s190 = scalar_lea.sflag [#allocation3], %s189
        %s191 = sand.u32 %s42, 1
        %s192 = smul.addr %s191, 32
        %s193 = scalar_lea.vmem [#allocation2], %s192
        %p194 = pneg %p55
        %p195 = pneg %p52
        %p196 = pneg %p76
        %p197 = pneg %p73
        %p198 = pneg %p97
        %p199 = pneg %p94
        %p200 = pneg %p125
        %p201 = pneg %p122
        %s202 = sand.u32 %s112, 1
        %s203 = scalar_lea.sflag [#allocation4], %s202
        %s204 = sand.u32 %s112, 1
        %s205 = smul.addr %s204, 4
        %s206 = scalar_lea.vmem [#allocation5], %s205
        %s207 = smul.u32 2, %s25
        %s208 = smul.u32 2, %s25
        %v210 = vld [vmem:[%s184] sm:$0xff]
        %v211 = vld [vmem:[%s184 + $0x8] sm:$0xff]
        %v212 = vld [vmem:[%s184 + $0x10] sm:$0xff]
        %v213 = vld [vmem:[%s184 + $0x18] sm:$0xff]
        %v214 = vld [vmem:[%s1] sm:$0xf]
        %v215 = vld [vmem:[%s1 + $0x4] sm:$0xf]
        %v216 = vld [vmem:[%s1 + $0x8] sm:$0xf]
        %v217 = vld [vmem:[%s1 + $0xc] sm:$0xf]
        %v218 = vld [vmem:[%s2] sm:$0xff]
        %v219 = vld [vmem:[%s2 + $0x8] sm:$0xff]
        %v220 = vld [vmem:[%s2 + $0x10] sm:$0xff]
        %v221 = vld [vmem:[%s2 + $0x18] sm:$0xff]
        %v226 = vunpack.c.l.b16 %v214
        %v227 = vunpack.c.l.b16 %v215
        %v228 = vunpack.c.l.b16 %v216
        %v229 = vunpack.c.l.b16 %v217
        %v230 = vpack.c.b16 %v227, %v226
        %v231 = vpack.c.b16 %v229, %v228
        %v236 = vunpack.c.l.b16 %v210
        %v237 = vunpack.c.h.b16 %v210
        %v238 = vunpack.c.l.b16 %v211
        %v239 = vunpack.c.h.b16 %v211
        %v240 = vunpack.c.l.b16 %v212
        %v241 = vunpack.c.h.b16 %v212
        %v242 = vunpack.c.l.b16 %v213
        %v243 = vunpack.c.h.b16 %v213
        %v244 = vpack.c.b16 %v238, %v236
        %v245 = vpack.c.b16 %v239, %v237
        %v246 = vpack.c.b16 %v242, %v240
        %v247 = vpack.c.b16 %v243, %v241
        %vm252 = vcmask 261120
        %v254 = vsel %vm252, %v230, 0
        %v257 = vsel %vm252, %v231, 0
        %259 = vmatprep.subr.bf16.mxu0 %v245
        %260 = vmatpush1.bf16.msra.mxu0 %v244
        %261 = vmatprep.subr.bf16.mxu0 %v247
        %262 = vmatpush1.bf16.msra.mxu0 %v246
        %263 = vmatprep.subr.bf16.mxu0 0
        %264 = vmatpush1.bf16.msra.mxu0 0
        %265 = vmatprep.subr.bf16.mxu0 0
        %266 = vmatpush1.bf16.msra.mxu0 0
        %267 = vmatprep.subr.bf16.mxu0 0
        %268 = vmatpush1.bf16.msra.mxu0 0
        %269 = vmatprep.subr.bf16.mxu0 0
        %270 = vmatpush1.bf16.msra.mxu0 0
        %271 = vmatprep.subr.bf16.mxu0 0
        %272 = vmatpush1.bf16.msra.mxu0 0
        %273 = vmatprep.subr.bf16.mxu0 0
        %274 = vmatpush1.bf16.msra.mxu0 0
        %275 = vmatprep.subr.bf16.mxu0 0
        %276 = vmatpush1.bf16.msra.mxu0 0
        %277 = vmatprep.subr.bf16.mxu0 0
        %278 = vmatpush1.bf16.msra.mxu0 0
        %279 = vmatprep.subr.bf16.mxu0 0
        %280 = vmatpush1.bf16.msra.mxu0 0
        %281 = vmatprep.subr.bf16.mxu0 0
        %282 = vmatpush1.bf16.msra.mxu0 0
        %283 = vmatprep.subr.bf16.mxu0 0
        %284 = vmatpush1.bf16.msra.mxu0 0
        %285 = vmatprep.subr.bf16.mxu0 0
        %286 = vmatpush1.bf16.msra.mxu0 0
        %287 = vmatprep.subr.bf16.mxu0 0
        %288 = vmatpush1.bf16.msra.mxu0 0
        %289 = vmatprep.subr.bf16.mxu0 0
        %290 = vmatpush1.bf16.msra.mxu0 0
        %291 = vmatprep.mubr.bf16.mxu0 0
        %292 = vmatmul.mubr.bf16.gmra.mrb[0].mxu0 %v254
        %v293 = vpop.f32.mrb[0].mxu0
        %v294 = vadd.f32 0.0, %v293
        %v295 = vpop.f32.mrb[0].mxu0
        %v296 = vadd.f32 0.0, %v295
        %v297 = vpop.f32.mrb[0].mxu0
        %v298 = vadd.f32 0.0, %v297
        %v299 = vpop.f32.mrb[0].mxu0
        %v300 = vadd.f32 0.0, %v299
        %301 = vmatprep.mubr.bf16.mxu0 0
        %302 = vmatmul.mubr.bf16.gmra.mrb[0].mxu0 %v257
        %v303 = vpop.f32.mrb[0].mxu0
        %v304 = vadd.f32 0.0, %v303
        %v305 = vpop.f32.mrb[0].mxu0
        %v306 = vadd.f32 0.0, %v305
        %v307 = vpop.f32.mrb[0].mxu0
        %v308 = vadd.f32 0.0, %v307
        %v309 = vpop.f32.mrb[0].mxu0
        %v310 = vadd.f32 0.0, %v309
        %311 = vdwg.mxu0
        %v312 = vunpack.c.l.bf16 %v210
        %v313 = vunpack.c.h.bf16 %v210
        %v314 = vunpack.c.l.bf16 %v211
        %v315 = vunpack.c.h.bf16 %v211
        %v316 = vunpack.c.l.bf16 %v212
        %v317 = vunpack.c.h.bf16 %v212
        %v318 = vunpack.c.l.bf16 %v213
        %v319 = vunpack.c.h.bf16 %v213
        %v320 = vmul.f32 %v312, %v312
        %v321 = vmul.f32 %v313, %v313
        %v322 = vmul.f32 %v314, %v314
        %v323 = vmul.f32 %v315, %v315
        %v324 = vmul.f32 %v316, %v316
        %v325 = vmul.f32 %v317, %v317
        %v326 = vmul.f32 %v318, %v318
        %v327 = vmul.f32 %v319, %v319
        %v328 = vadd.f32 %v320, %v322
        %v329 = vadd.f32 %v328, %v324
        %v330 = vadd.f32 %v329, %v326
        %v331 = vrot.slane %v330, 4
        %v332 = vadd.f32 %v330, %v331
        %v333 = vrot.slane %v332, 2
        %v334 = vadd.f32 %v332, %v333
        %v335 = vrot.slane %v334, 1
        %v336 = vadd.f32 %v334, %v335
        %v337 = vadd.f32 %v321, %v323
        %v338 = vadd.f32 %v337, %v325
        %v339 = vadd.f32 %v338, %v327
        %v340 = vrot.slane %v339, 4
        %v341 = vadd.f32 %v339, %v340
        %v342 = vrot.slane %v341, 2
        %v343 = vadd.f32 %v341, %v342
        %v344 = vrot.slane %v343, 1
        %v345 = vadd.f32 %v343, %v344
        %v346 = vmax.f32 %v336, 1e-08
        %v347 = vmax.f32 %v345, 1e-08
        %v348 = vrsqrt.pop %v346
        %v349 = vrsqrt.pop %v347
        %v350 = vmul.f32 %v348, 20.0
        %v351 = vmul.f32 %v349, 20.0
        %v352 = vmul.f32 %v294, %v350
        %v353 = vmul.f32 %v296, %v351
        %v354 = vmul.f32 %v298, %v350
        %v355 = vmul.f32 %v300, %v351
        %v356 = vmul.f32 %v304, %v350
        %v357 = vmul.f32 %v306, %v351
        %v358 = vmul.f32 %v308, %v350
        %v359 = vmul.f32 %v310, %v351
        %vm360 = vcmp.ge.f32.partialorder %v218, 0.0
        %vm361 = vcmp.ge.f32.partialorder %v219, 0.0
        %vm362 = vcmp.ge.f32.partialorder %v220, 0.0
        %vm363 = vcmp.ge.f32.partialorder %v221, 0.0
        %v364 = vsel %vm360, 0.0, -1e+30
        %v365 = vsel %vm361, 0.0, -1e+30
        %v366 = vsel %vm362, 0.0, -1e+30
        %v367 = vsel %vm363, 0.0, -1e+30
        %369 = vset.pattern.permute.xlu0 0
        %370 = vperm.xlu0 %369, %v364
        %v371 = vpop.permute.xlu0 %370
        %374 = vset.pattern.permute.xlu0 0
        %375 = vperm.xlu0 %374, %v365
        %v376 = vpop.permute.xlu0 %375
        %379 = vset.pattern.permute.xlu0 0
        %380 = vperm.xlu0 %379, %v366
        %v381 = vpop.permute.xlu0 %380
        %384 = vset.pattern.permute.xlu0 0
        %385 = vperm.xlu0 %384, %v367
        %v386 = vpop.permute.xlu0 %385
        %v388 = vadd.f32 %v352, %v371
        %v389 = vadd.f32 %v353, %v371
        %v390 = vadd.f32 %v354, %v376
        %v391 = vadd.f32 %v355, %v376
        %v392 = vadd.f32 %v356, %v381
        %v393 = vadd.f32 %v357, %v381
        %v394 = vadd.f32 %v358, %v386
        %v395 = vadd.f32 %v359, %v386
        %v396 = vmax.f32 %v388, %v392
        %v397 = vmax.f32 %v390, %v394
        %v398 = vmax.f32 %v396, %v397
        %v399 = vrot.slane %v398, 4
        %v400 = vmax.f32 %v398, %v399
        %v401 = vrot.slane %v400, 2
        %v402 = vmax.f32 %v400, %v401
        %v403 = vrot.slane %v402, 1
        %v404 = vmax.f32 %v402, %v403
        %v405 = vmax.f32 %v389, %v393
        %v406 = vmax.f32 %v391, %v395
        %v407 = vmax.f32 %v405, %v406
        %v408 = vrot.slane %v407, 4
        %v409 = vmax.f32 %v407, %v408
        %v410 = vrot.slane %v409, 2
        %v411 = vmax.f32 %v409, %v410
        %v412 = vrot.slane %v411, 1
        %v413 = vmax.f32 %v411, %v412
        %v414 = vsub.f32 %v388, %v404
        %v415 = vsub.f32 %v389, %v413
        %v416 = vsub.f32 %v390, %v404
        %v417 = vsub.f32 %v391, %v413
        %v418 = vsub.f32 %v392, %v404
        %v419 = vsub.f32 %v393, %v413
        %v420 = vsub.f32 %v394, %v404
        %v421 = vsub.f32 %v395, %v413
        %v422 = vmul.f32 %v414, 1.442695
        %v423 = vpow.pop %v422
        %v424 = vmul.f32 %v415, 1.442695
        %v425 = vpow.pop %v424
        %v426 = vmul.f32 %v416, 1.442695
        %v427 = vpow.pop %v426
        %v428 = vmul.f32 %v417, 1.442695
        %v429 = vpow.pop %v428
        %v430 = vmul.f32 %v418, 1.442695
        %v431 = vpow.pop %v430
        %v432 = vmul.f32 %v419, 1.442695
        %v433 = vpow.pop %v432
        %v434 = vmul.f32 %v420, 1.442695
        %v435 = vpow.pop %v434
        %v436 = vmul.f32 %v421, 1.442695
        %v437 = vpow.pop %v436
        %v438 = vadd.f32 %v423, %v427
        %v439 = vadd.f32 %v438, %v431
        %v440 = vadd.f32 %v439, %v435
        %v441 = vrot.slane %v440, 4
        %v442 = vadd.f32 %v440, %v441
        %v443 = vrot.slane %v442, 2
        %v444 = vadd.f32 %v442, %v443
        %v445 = vrot.slane %v444, 1
        %v446 = vadd.f32 %v444, %v445
        %v447 = vadd.f32 %v425, %v429
        %v448 = vadd.f32 %v447, %v433
        %v449 = vadd.f32 %v448, %v437
        %v450 = vrot.slane %v449, 4
        %v451 = vadd.f32 %v449, %v450
        %v452 = vrot.slane %v451, 2
        %v453 = vadd.f32 %v451, %v452
        %v454 = vrot.slane %v453, 1
        %v455 = vadd.f32 %v453, %v454
        %v456 = vmul.f32 %v423, %v352
        %v457 = vmul.f32 %v425, %v353
        %v458 = vmul.f32 %v427, %v354
        %v459 = vmul.f32 %v429, %v355
        %v460 = vmul.f32 %v431, %v356
        %v461 = vmul.f32 %v433, %v357
        %v462 = vmul.f32 %v435, %v358
        %v463 = vmul.f32 %v437, %v359
        %v464 = vadd.f32 %v456, %v458
        %v465 = vadd.f32 %v464, %v460
        %v466 = vadd.f32 %v465, %v462
        %v467 = vrot.slane %v466, 4
        %v468 = vadd.f32 %v466, %v467
        %v469 = vrot.slane %v468, 2
        %v470 = vadd.f32 %v468, %v469
        %v471 = vrot.slane %v470, 1
        %v472 = vadd.f32 %v470, %v471
        %v473 = vadd.f32 %v457, %v459
        %v474 = vadd.f32 %v473, %v461
        %v475 = vadd.f32 %v474, %v463
        %v476 = vrot.slane %v475, 4
        %v477 = vadd.f32 %v475, %v476
        %v478 = vrot.slane %v477, 2
        %v479 = vadd.f32 %v477, %v478
        %v480 = vrot.slane %v479, 1
        %v481 = vadd.f32 %v479, %v480
        %v482 = vrcp.pop %v446
        %v483 = vmul.f32 %v472, %v482
        %v484 = vrcp.pop %v455
        %v485 = vmul.f32 %v481, %v484
        %vm486 = vcmp.eq.f32.partialorder %v388, %v404
        %vm487 = vcmp.eq.f32.partialorder %v389, %v413
        %vm488 = vcmp.eq.f32.partialorder %v390, %v404
        %vm489 = vcmp.eq.f32.partialorder %v391, %v413
        %vm490 = vcmp.eq.f32.partialorder %v392, %v404
        %vm491 = vcmp.eq.f32.partialorder %v393, %v413
        %vm492 = vcmp.eq.f32.partialorder %v394, %v404
        %vm493 = vcmp.eq.f32.partialorder %v395, %v413
        %v494 = vsel %vm360, 1, 0
        %v495 = vsel %vm361, 1, 0
        %v496 = vsel %vm362, 1, 0
        %v497 = vsel %vm363, 1, 0
        %498 = vset.pattern.permute.xlu0 0
        %499 = vperm.xlu0 %498, %v494
        %v500 = vpop.permute.xlu0 %499
        %501 = vset.pattern.permute.xlu0 0
        %502 = vperm.xlu0 %501, %v495
        %v503 = vpop.permute.xlu0 %502
        %504 = vset.pattern.permute.xlu0 0
        %505 = vperm.xlu0 %504, %v496
        %v506 = vpop.permute.xlu0 %505
        %507 = vset.pattern.permute.xlu0 0
        %508 = vperm.xlu0 %507, %v497
        %v509 = vpop.permute.xlu0 %508
        %vm510 = vcmp.eq.s32.totalorder %v500, 1
        %vm511 = vcmp.eq.s32.totalorder %v503, 1
        %vm512 = vcmp.eq.s32.totalorder %v506, 1
        %vm513 = vcmp.eq.s32.totalorder %v509, 1
        %vm514 = vmand %vm486, %vm510
        %vm515 = vmand %vm487, %vm510
        %vm516 = vmand %vm488, %vm511
        %vm517 = vmand %vm489, %vm511
        %vm518 = vmand %vm490, %vm512
        %vm519 = vmand %vm491, %vm512
        %vm520 = vmand %vm492, %vm513
        %vm521 = vmand %vm493, %vm513
        %523 = vset.pattern.permute.xlu0 0
        %524 = vperm.xlu0 %523, %v218
        %v525 = vpop.permute.xlu0 %524
        %528 = vset.pattern.permute.xlu0 0
        %529 = vperm.xlu0 %528, %v219
        %v530 = vpop.permute.xlu0 %529
        %533 = vset.pattern.permute.xlu0 0
        %534 = vperm.xlu0 %533, %v220
        %v535 = vpop.permute.xlu0 %534
        %538 = vset.pattern.permute.xlu0 0
        %539 = vperm.xlu0 %538, %v221
        %v540 = vpop.permute.xlu0 %539
        %v542 = vsel %vm514, %v525, 32.0
        %v543 = vsel %vm515, %v525, 32.0
        %v544 = vsel %vm516, %v530, 32.0
        %v545 = vsel %vm517, %v530, 32.0
        %v546 = vsel %vm518, %v535, 32.0
        %v547 = vsel %vm519, %v535, 32.0
        %v548 = vsel %vm520, %v540, 32.0
        %v549 = vsel %vm521, %v540, 32.0
        %v550 = vmin.f32 %v542, %v546
        %v551 = vmin.f32 %v544, %v548
        %v552 = vmin.f32 %v550, %v551
        %v553 = vrot.slane %v552, 4
        %v554 = vmin.f32 %v552, %v553
        %v555 = vrot.slane %v554, 2
        %v556 = vmin.f32 %v554, %v555
        %v557 = vrot.slane %v556, 1
        %v558 = vmin.f32 %v556, %v557
        %v559 = vmin.f32 %v543, %v547
        %v560 = vmin.f32 %v545, %v549
        %v561 = vmin.f32 %v559, %v560
        %v562 = vrot.slane %v561, 4
        %v563 = vmin.f32 %v561, %v562
        %v564 = vrot.slane %v563, 2
        %v565 = vmin.f32 %v563, %v564
        %v566 = vrot.slane %v565, 1
        %v567 = vmin.f32 %v565, %v566
        %v570 = vcombine.low %v483, %v485
        %v572 = vunpack.c.l.s4 1966171168
        %v573 = vunpack.c.0.s8 %v572
        %v574 = vlaneseq
        %v575 = vshrl.u32 %v574, 7
        %v576 = vsub.s32 %v573, %v575
        %v577 = vrot.slane %v570, %v576
        %v579 = vunpack.c.l.s4 1966171168
        %v580 = vunpack.c.0.s8 %v579
        %v581 = vlaneseq
        %v582 = vshrl.u32 %v581, 7
        %v583 = vsub.s32 %v580, %v582
        %v584 = vrot.slane %v577, %v583
        %v586 = vlaneseq
        %vm587 = vcmp.ge.s32.totalorder %v586, 0
        %vm588 = vcmp.lt.s32.totalorder %v586, 256
        %vm589 = vmand %vm587, %vm588
        %590 = vst.msk [vmem:[%s206] ss:$2 sm:$0x3] %vm589, %v584
        %v593 = vcombine.low %v558, %v567
        %v595 = vunpack.c.l.s4 1966171168
        %v596 = vunpack.c.0.s8 %v595
        %v597 = vlaneseq
        %v598 = vshrl.u32 %v597, 7
        %v599 = vsub.s32 %v596, %v598
        %v600 = vrot.slane %v593, %v599
        %v602 = vunpack.c.l.s4 1966171168
        %v603 = vunpack.c.0.s8 %v602
        %v604 = vlaneseq
        %v605 = vshrl.u32 %v604, 7
        %v606 = vsub.s32 %v603, %v605
        %v607 = vrot.slane %v600, %v606
        %s609 = scalar_lea.vmem %s206, 1 [#allocation5]
        %610 = vst.msk [vmem:[%s609] ss:$2 sm:$0x3] %vm589, %v607
        %s611 = sand.u32 %s112, 1
        %s612 = scalar_lea.sflag [#allocation4], %s611
        %s613 = sand.u32 %s112, 1
        %s614 = smul.addr %s613, 4
        %s615 = scalar_lea.vmem [#allocation5], %s614
        // Predicated region
        $region37: #{tpu_custom_call.1} parent=31 // pred_check
          %p616 = pneg %p122
        $region38: #{tpu_custom_call.1} parent=31 // pred_check_branch
          %618 = sbr.rel (%p616) target = $region40
        $region39: #{tpu_custom_call.1} parent=31 // pred_region
          %s619 = smul.u32 2, %s25
          %s621 = ssub.s32 64, 64
          %622 = vsyncadd %s612, %s621
          %s623 = smul.addr %s24, 2
          %s624 = sadd.s32 %s619, %s623
          %s625 = smul.addr %s624, 32
          %s626 = scalar_lea.hbm %s3, %s625
          %s628 = sshll.u32 %s615, 4
          %s629 = int_to_ptr.vmem [resolvable:$true] %s628
          %631 = dma.vmem_to_hbm [thread:$0]  %s629, 64, %s626, %s612
        $region40: #{tpu_custom_call.1} parent=31 // pred_fallthru
          _
      $region32: #{tpu_custom_call.1} parent=5 // pred_fallthru
        _
      %p632 = scmp.le.s32.totalorder 2, %s15
      // Predicated region
      $region41: #{tpu_custom_call.1} parent=5 // pred_check
        %p633 = pneg %p632
      $region42: #{tpu_custom_call.1} parent=5 // pred_check_branch
        %635 = sbr.rel (%p633) target = $region44
      $region43: #{tpu_custom_call.1} parent=5 // pred_region
        %s636 = ssub.s32 %s15, 2
        // Predicated region
        $region45: #{tpu_custom_call.1} parent=43 // pred_check
          %p637 = pneg %p128
        $region46: #{tpu_custom_call.1} parent=43 // pred_check_branch
          %639 = sbr.rel (%p637) target = $region48
        $region47: #{tpu_custom_call.1} parent=43 // pred_region
          %s640 = sand.u32 %s113, 1
          %s641 = scalar_lea.sflag [#allocation4], %s640
          %s642 = sand.u32 %s113, 1
          %s643 = smul.addr %s642, 4
          %s644 = scalar_lea.vmem [#allocation5], %s643
          %645 = dma.done %s641, 64
        $region48: #{tpu_custom_call.1} parent=43 // pred_fallthru
          _
      $region44: #{tpu_custom_call.1} parent=5 // pred_fallthru
        _
    $region6: #{tpu_custom_call.1} parent=1 // loop_footer
      %s19 = sadd.s32 1, %s15
    $region7: #{tpu_custom_call.1} parent=1 // loop_footer_branch
      %14 = sbr.rel target = $region3
    $region8: #{tpu_custom_call.1} parent=1 // loop_exit
      _
    %646 = vsyncpa [#allocation3], 1
    %s647 = scalar_lea.sflag [#allocation3], 1
    %648 = vsyncpa %s647, 1
    %649 = vsyncpa [#allocation4], 1
    %s650 = scalar_lea.sflag [#allocation4], 1
    %651 = vsyncpa %s650, 1

</llo_original>
